<compile_context>
chip_gen: v6e
topology: v6e:2x2x1
jax: 0.10.0
libtpu: 0.0.40
codegen_flags: <defaults>
</compile_context>

<pallas_src>
import jax
import jax.numpy as jnp
from jax.experimental import pallas as pl
from jax.experimental.pallas import tpu as pltpu

LATENT_DIMS = 3
IN_FEATURES = 5
HIDDEN = 512
LANE = 128


def _round_up(n, m):
    return ((n + m - 1) // m) * m


def encoder_kernel(xe_ref, w1T_ref, b1_ref, wlatT_ref, blat_ref, zT_ref, kl_ref):
    # Packed input block: rows 0:5 = x^T (5, TB), rows 5:8 = eps^T (3, TB).
    xe = xe_ref[...]                                   # (8, TB) f32
    xT = xe[:IN_FEATURES, :]                           # (5, TB)
    epsT = xe[IN_FEATURES:, :]                         # (3, TB)

    # linear1 (transposed): h^T = W1^T @ x^T, bf16 operands, f32 accumulation.
    hT = jnp.dot(w1T_ref[...], xT.astype(jnp.bfloat16),
                 preferred_element_type=jnp.float32)   # (512, TB) f32
    hT = jnp.maximum(hT + b1_ref[...], 0.0)            # bias (512,1) broadcast on lanes

    # Fused latent projection (transposed): y^T = [W2|W3]^T @ h^T -> (6, TB).
    yT = jnp.dot(wlatT_ref[...], hT.astype(jnp.bfloat16),
                 preferred_element_type=jnp.float32) + blat_ref[...]

    muT = yT[:LATENT_DIMS, :]                          # (3, TB)
    logsigT = yT[LATENT_DIMS:, :]                      # (3, TB)
    sigmaT = jnp.exp(logsigT)

    # Reparameterized sample (lane-dense direct store, no concatenate).
    zT_ref[...] = muT + sigmaT * epsT

    # Per-row KL partial: sum_j (sigma^2 + mu^2 - log(sigma) - 1/2).
    # Cross-sublane reduce (3 -> 1) runs on the XLU.
    kl_ref[...] = jnp.sum(sigmaT * sigmaT + muT * muT - logsigT - 0.5,
                          axis=0, keepdims=True)       # (1, TB)


def variational_encoder_forward(x, params, eps, *, block_b=4096):
    """x: (B, 5) f32, eps: (B, latent) f32.  Returns (z: (B, latent), kl: scalar)."""
    w1, b1, w2, b2, w3, b3 = params

    # Pre-transpose / pre-cast weights once (traced under jit; tiny arrays).
    w1T = w1.T.astype(jnp.bfloat16)                               # (512, 5)   bf16
    b1T = b1.reshape(HIDDEN, 1)                                   # (512, 1)   f32
    wlatT = jnp.concatenate([w2, w3], axis=1).T.astype(jnp.bfloat16)  # (6, 512) bf16
    blatT = jnp.concatenate([b2, b3], axis=1).reshape(2 * LATENT_DIMS, 1)  # (6, 1)

    B = x.shape[0]

    # Batch tile: lane axis, so it must be a multiple of 128.
    tb = min(block_b, _round_up(B, LANE))
    # v7x has 2 TensorCores: make sure the "parallel" batch grid has >= 2 steps.
    if _round_up(B, tb) // tb < 2 and tb > LANE:
        tb = max(LANE, (tb // 2 // LANE) * LANE)
    b_pad = _round_up(B, tb)
    if b_pad // tb < 2:
        b_pad = 2 * tb   # tiny batch: one extra (cheap, zero-filled) tile

    # Packed, lane-dense input: rows 0:5 = x^T, rows 5:8 = eps^T.
    xeT = jnp.concatenate([x.T, eps.T], axis=0)                   # (8, B)
    xeT = jnp.pad(xeT, ((0, 0), (0, b_pad - B)))                  # (8, b_pad)

    zT, klT = pl.pallas_call(
        encoder_kernel,
        out_shape=(
            jax.ShapeDtypeStruct((LATENT_DIMS, b_pad), jnp.float32),  # z^T
            jax.ShapeDtypeStruct((1, b_pad), jnp.float32),            # per-row KL
        ),
        grid=(b_pad // tb,),
        in_specs=[
            pl.BlockSpec((IN_FEATURES + LATENT_DIMS, tb), lambda i: (0, i)),  # [x|eps]^T
            pl.BlockSpec((HIDDEN, IN_FEATURES), lambda i: (0, 0)),            # W1^T (resident)
            pl.BlockSpec((HIDDEN, 1), lambda i: (0, 0)),                      # b1
            pl.BlockSpec((2 * LATENT_DIMS, HIDDEN), lambda i: (0, 0)),        # [W2|W3]^T
            pl.BlockSpec((2 * LATENT_DIMS, 1), lambda i: (0, 0)),             # [b2|b3]
        ],
        out_specs=(
            pl.BlockSpec((LATENT_DIMS, tb), lambda i: (0, i)),
            pl.BlockSpec((1, tb), lambda i: (0, i)),
        ),
        compiler_params=pltpu.CompilerParams(
            dimension_semantics=("parallel",),        # megacore batch sharding on v7x
            vmem_limit_bytes=48 * 1024 * 1024),       # headroom for tb=4096 (fits v7x 64 MiB)
    )(xeT, w1T, b1T, wlatT, blatT)

    z = zT[:, :B].T                                   # (B, 3)
    kl = jnp.sum(klT[0, :B])
    return z, kl


def init_params(key):
    """Deterministic init; shapes match nn.Linear(5,512), Linear(512,3) x2.
    Weights stored as (in_features, out_features). Biases as (1, out)."""
    k1, k2, k3, k4, k5, k6 = jax.random.split(key, 6)

    def lin(kw, kb, fan_in, fan_out):
        bound = 1.0 / jnp.sqrt(fan_in)
        w = jax.random.uniform(kw, (fan_in, fan_out), jnp.float32, -bound, bound)
        b = jax.random.uniform(kb, (1, fan_out), jnp.float32, -bound, bound)
        return w, b

    w1, b1 = lin(k1, k2, IN_FEATURES, HIDDEN)
    w2, b2 = lin(k3, k4, HIDDEN, LATENT_DIMS)
    w3, b3 = lin(k5, k6, HIDDEN, LATENT_DIMS)
    return (w1, b1, w2, b2, w3, b3)


def reference_forward(x, params, eps):
    """Plain-JAX f32 reference replicating the PyTorch forward exactly."""
    w1, b1, w2, b2, w3, b3 = params
    h = jax.nn.relu(x @ w1 + b1)
    mu = h @ w2 + b2
    sigma = jnp.exp(h @ w3 + b3)
    z = mu + sigma * eps
    kl = jnp.sum(sigma ** 2 + mu ** 2 - jnp.log(sigma) - 0.5)
    return z, kl


if __name__ == "__main__":
    key = jax.random.PRNGKey(0)
    kx, kp, ke = jax.random.split(key, 3)

    B = 8
    x = jax.random.normal(kx, (B, IN_FEATURES), jnp.float32)
    params = init_params(kp)
    # torch's self.N.sample(mu.shape) -> deterministic standard-normal noise here.
    eps = jax.random.normal(ke, (B, LATENT_DIMS), jnp.float32)

    z, kl = variational_encoder_forward(x, params, eps)
    jax.block_until_ready((z, kl))

    z_ref, kl_ref = reference_forward(x, params, eps)
    assert z.shape == (B, LATENT_DIMS)
    # Tolerances loosened for bf16 MXU operands (f32 accumulation).
    assert jnp.allclose(z, z_ref, atol=5e-2, rtol=5e-2), "z mismatch vs reference"
    assert jnp.allclose(kl, kl_ref, atol=5e-1, rtol=5e-2), "kl mismatch vs reference"

    print("KERNEL_OK")
</pallas_src>

<mosaic_0001>
module attributes {stable_mosaic.version = 11 : i64} {
  func.func @encoder_kernel(%arg0: i32, %arg1: memref<8x128xf32, #tpu.memory_space<vmem>>, %arg2: memref<512x5xbf16, #tpu.memory_space<vmem>>, %arg3: memref<512x1xf32, #tpu.memory_space<vmem>>, %arg4: memref<6x512xbf16, #tpu.memory_space<vmem>>, %arg5: memref<6x1xf32, #tpu.memory_space<vmem>>, %arg6: memref<3x128xf32, #tpu.memory_space<vmem>>, %arg7: memref<1x128xf32, #tpu.memory_space<vmem>>) attributes {dimension_semantics = [#tpu.dimension_semantics<parallel>], iteration_bounds = array<i64: 2>, scalar_prefetch = 0 : i64, scratch_operands = 0 : i64, tpu.core_type = #tpu.core_type<tc>, window_params = [{transform_indices = @transform_0, window_bounds = array<i64: 8, 128>}, {pipeline_mode = #tpu.pipeline_mode<synchronous>, transform_indices = @transform_1, window_bounds = array<i64: 512, 5>}, {pipeline_mode = #tpu.pipeline_mode<synchronous>, transform_indices = @transform_2, window_bounds = array<i64: 512, 1>}, {pipeline_mode = #tpu.pipeline_mode<synchronous>, transform_indices = @transform_3, window_bounds = array<i64: 6, 512>}, {pipeline_mode = #tpu.pipeline_mode<synchronous>, transform_indices = @transform_4, window_bounds = array<i64: 6, 1>}, {transform_indices = @transform_5, window_bounds = array<i64: 3, 128>}, {transform_indices = @transform_6, window_bounds = array<i64: 1, 128>}]} {
    %c0 = arith.constant 0 : index
    %c0_0 = arith.constant 0 : index
    %0 = vector.load %arg1[%c0, %c0_0] : memref<8x128xf32, #tpu.memory_space<vmem>>, vector<8x128xf32>
    %1 = vector.extract_strided_slice %0 {offsets = [0, 0], sizes = [5, 128], strides = [1, 1]} : vector<8x128xf32> to vector<5x128xf32>
    %2 = vector.extract_strided_slice %0 {offsets = [5, 0], sizes = [3, 128], strides = [1, 1]} : vector<8x128xf32> to vector<3x128xf32>
    %c0_1 = arith.constant 0 : index
    %c0_2 = arith.constant 0 : index
    %3 = vector.load %arg2[%c0_1, %c0_2] : memref<512x5xbf16, #tpu.memory_space<vmem>>, vector<512x5xbf16>
    %4 = arith.truncf %1 : vector<5x128xf32> to vector<5x128xbf16>
    %cst = arith.constant dense<0.000000e+00> : vector<512x128xf32>
    %5 = tpu.matmul %3, %4, %cst {dimension_numbers = #tpu.dot_dimension_numbers<[1], [0], [0], [1], [0, 0, 1, 1], [], []>} : vector<512x5xbf16>, vector<5x128xbf16>, vector<512x128xf32> -> vector<512x128xf32>
    %c0_3 = arith.constant 0 : index
    %c0_4 = arith.constant 0 : index
    %6 = vector.load %arg3[%c0_3, %c0_4] : memref<512x1xf32, #tpu.memory_space<vmem>>, vector<512x1xf32>
    %7 = vector.broadcast %6 : vector<512x1xf32> to vector<512x128xf32>
    %8 = arith.addf %5, %7 : vector<512x128xf32>
    %cst_5 = arith.constant 0.000000e+00 : f32
    %9 = vector.broadcast %cst_5 : f32 to vector<512x128xf32>
    %10 = arith.maximumf %8, %9 : vector<512x128xf32>
    %c0_6 = arith.constant 0 : index
    %c0_7 = arith.constant 0 : index
    %11 = vector.load %arg4[%c0_6, %c0_7] : memref<6x512xbf16, #tpu.memory_space<vmem>>, vector<6x512xbf16>
    %12 = arith.truncf %10 : vector<512x128xf32> to vector<512x128xbf16>
    %cst_8 = arith.constant dense<0.000000e+00> : vector<6x128xf32>
    %13 = tpu.matmul %11, %12, %cst_8 {dimension_numbers = #tpu.dot_dimension_numbers<[1], [0], [0], [1], [0, 0, 1, 1], [], []>} : vector<6x512xbf16>, vector<512x128xbf16>, vector<6x128xf32> -> vector<6x128xf32>
    %c0_9 = arith.constant 0 : index
    %c0_10 = arith.constant 0 : index
    %14 = vector.load %arg5[%c0_9, %c0_10] : memref<6x1xf32, #tpu.memory_space<vmem>>, vector<6x1xf32>
    %15 = vector.broadcast %14 : vector<6x1xf32> to vector<6x128xf32>
    %16 = arith.addf %13, %15 : vector<6x128xf32>
    %17 = vector.extract_strided_slice %16 {offsets = [0, 0], sizes = [3, 128], strides = [1, 1]} : vector<6x128xf32> to vector<3x128xf32>
    %18 = vector.extract_strided_slice %16 {offsets = [3, 0], sizes = [3, 128], strides = [1, 1]} : vector<6x128xf32> to vector<3x128xf32>
    %19 = math.exp %18 : vector<3x128xf32>
    %20 = arith.mulf %19, %2 : vector<3x128xf32>
    %21 = arith.addf %17, %20 : vector<3x128xf32>
    %c0_11 = arith.constant 0 : index
    %c0_12 = arith.constant 0 : index
    %22 = vector.load %arg6[%c0_11, %c0_12] : memref<3x128xf32, #tpu.memory_space<vmem>>, vector<3x128xf32>
    tpu.vector_store %arg6[%c0_11, %c0_12], %21 {strides = array<i32>} : memref<3x128xf32, #tpu.memory_space<vmem>>, vector<3x128xf32>,
    %23 = arith.mulf %19, %19 : vector<3x128xf32>
    %24 = arith.mulf %17, %17 : vector<3x128xf32>
    %25 = arith.addf %23, %24 : vector<3x128xf32>
    %26 = arith.subf %25, %18 : vector<3x128xf32>
    %cst_13 = arith.constant 5.000000e-01 : f32
    %27 = vector.broadcast %cst_13 : f32 to vector<3x128xf32>
    %28 = arith.subf %26, %27 : vector<3x128xf32>
    %cst_14 = arith.constant dense<0.000000e+00> : vector<128xf32>
    %29 = vector.multi_reduction <add>, %28, %cst_14 [0] : vector<3x128xf32> to vector<128xf32>
    %30 = vector.shape_cast %29 : vector<128xf32> to vector<1x128xf32>
    %c0_15 = arith.constant 0 : index
    %c0_16 = arith.constant 0 : index
    %31 = vector.load %arg7[%c0_15, %c0_16] : memref<1x128xf32, #tpu.memory_space<vmem>>, vector<1x128xf32>
    tpu.vector_store %arg7[%c0_15, %c0_16], %30 {strides = array<i32>} : memref<1x128xf32, #tpu.memory_space<vmem>>, vector<1x128xf32>,
    return
  }
  func.func @transform_0(%arg0: i32) -> (i32, i32) {
    %c0_i32 = arith.constant 0 : i32
    %c0_i32_0 = arith.constant 0 : i32
    return %c0_i32, %arg0 : i32, i32
  }
  func.func @transform_1(%arg0: i32) -> (i32, i32) {
    %c0_i32 = arith.constant 0 : i32
    %c0_i32_0 = arith.constant 0 : i32
    %c0_i32_1 = arith.constant 0 : i32
    return %c0_i32, %c0_i32_0 : i32, i32
  }
  func.func @transform_2(%arg0: i32) -> (i32, i32) {
    %c0_i32 = arith.constant 0 : i32
    %c0_i32_0 = arith.constant 0 : i32
    %c0_i32_1 = arith.constant 0 : i32
    return %c0_i32, %c0_i32_0 : i32, i32
  }
  func.func @transform_3(%arg0: i32) -> (i32, i32) {
    %c0_i32 = arith.constant 0 : i32
    %c0_i32_0 = arith.constant 0 : i32
    %c0_i32_1 = arith.constant 0 : i32
    return %c0_i32, %c0_i32_0 : i32, i32
  }
  func.func @transform_4(%arg0: i32) -> (i32, i32) {
    %c0_i32 = arith.constant 0 : i32
    %c0_i32_0 = arith.constant 0 : i32
    %c0_i32_1 = arith.constant 0 : i32
    return %c0_i32, %c0_i32_0 : i32, i32
  }
  func.func @transform_5(%arg0: i32) -> (i32, i32) {
    %c0_i32 = arith.constant 0 : i32
    %c0_i32_0 = arith.constant 0 : i32
    return %c0_i32, %arg0 : i32, i32
  }
  func.func @transform_6(%arg0: i32) -> (i32, i32) {
    %c0_i32 = arith.constant 0 : i32
    %c0_i32_0 = arith.constant 0 : i32
    return %c0_i32, %arg0 : i32, i32
  }
}

</mosaic_0001>

<llo_original>
// kernel: tpu_custom_call.1
$region0: #{tpu_custom_call.1}
  #allocation0 [shape = 'u32[]', space=smem, size = 0x4, offset = 0x4, fixed_abs, tag = 'smem constant byte address 0x4 - core index']
  #allocation1 [shape = 'u32[144,128]{1,0:T(1,128)}', space=vmem, size = 0x12000, scoped, tag = 'internal scratch']
  %s0 = inlined_call_operand.vmem [shape: f32[8,256], index: 0, kind: input, shape index: {}]
  %s1 = inlined_call_operand.vmem [shape: bf16[512,5], index: 1, kind: input, shape index: {}]
  %s2 = inlined_call_operand.vmem [shape: f32[512,1], index: 2, kind: input, shape index: {}]
  %s3 = inlined_call_operand.vmem [shape: bf16[6,512], index: 3, kind: input, shape index: {}]
  %s4 = inlined_call_operand.vmem [shape: f32[6,1], index: 4, kind: input, shape index: {}]
  %s5 = inlined_call_operand.hbm [shape: f32[3,256], index: 5, kind: output, shape index: {0}]
  %s6 = inlined_call_operand.hbm [shape: f32[1,256], index: 6, kind: output, shape index: {1}]
  %7 = xla_tuple %s5, %s6
  %s8 = sld [smem:[#allocation0]]
  $region61: #{tpu_custom_call.1} parent=0
    _
  %s10 = ssub.s32 1, %s8
  %s11 = scalar_select 0, %s10, %s8
  $region1: #{tpu_custom_call.1} parent=0
    #allocation2 [shape = 'u8[4096]{0}', space=vmem, size = 0x1000, scoped, tag = 'output window, operand 0']
    #allocation3 [shape = 's32[2]{0}', space=sflag, size = 0x8, scoped, tag = 'scoped memory for tpu_custom_call.1']
    #allocation4 [shape = 'u8[1024]{0}', space=vmem, size = 0x400, scoped, tag = 'output window, operand 1']
    #allocation5 [shape = 's32[2]{0}', space=sflag, size = 0x8, scoped, tag = 'scoped memory for tpu_custom_call.1']
    %12 = vsyncpa [#allocation3], 0
    %s13 = scalar_lea.sflag [#allocation3], 1
    %14 = vsyncpa %s13, 0
    %15 = vsyncpa [#allocation5], 0
    %s16 = scalar_lea.sflag [#allocation5], 1
    %17 = vsyncpa %s16, 0
    loop: start=0, step=1, limit=4
    $region2: #{tpu_custom_call.1} parent=1 // loop_pre_header
      _
    $region3: #{tpu_custom_call.1} parent=1 // loop_header
      %s19 = sphi 0, %s23
      %p20 = scmp.ge.s32.totalorder %s19, 4
      %s29 = sphi 0, %s31
      %s32 = sphi 0, %s29
      %s33 = sphi 0, %s32
      %s49 = sphi 0, %s33
      %s53 = sphi 0, %s53
      %s55 = sphi 0, %s53
      %s56 = sphi 0, %s55
      %s70 = sphi 0, %s56
      %s74 = sphi 0, %s74
      %s76 = sphi 0, %s74
      %s77 = sphi 0, %s76
      %s91 = sphi 0, %s77
      %s95 = sphi 0, %s95
      %s97 = sphi 0, %s95
      %s98 = sphi 0, %s97
      %s112 = sphi 0, %s98
      %s116 = sphi 0, %s116
      %s118 = sphi 0, %s116
      %s119 = sphi 0, %s118
      %s133 = sphi 0, %s119
      %s139 = sphi 0, %s141
      %s142 = sphi 0, %s139
      %s143 = sphi 0, %s142
      %s159 = sphi 0, %s143
      %s165 = sphi 0, %s167
      %s168 = sphi 0, %s165
      %s169 = sphi 0, %s168
      %s185 = sphi 0, %s169
    $region4: #{tpu_custom_call.1} parent=1 // loop_header_branch
      %22 = sbr.rel (%p20) target = $region8
    $region5: #{tpu_custom_call.1} parent=1 // loop_body
      %s24 = ssub.s32 %s19, 1
      %s25 = ssub.s32 %s19, 2
      %s26 = sadd.s32 %s19, 1
      %s27 = ssub.s32 %s19, %s26
      %p28 = scmp.eq.s32.totalorder %s27, 0
      %s30 = sadd.s32 %s29, 1
      %s31 = scalar_select %p28, %s29, %s30
      %p34 = pneg %p28
      %p35 = scmp.eq.s32.totalorder %s19, 1
      %p36 = por %p34, %p35
      %p37 = scmp.ne.s32.totalorder %s29, %s32
      %p38 = scmp.eq.s32.totalorder %s19, 0
      %p39 = por %p37, %p38
      %p40 = scmp.ne.s32.totalorder %s29, %s32
      %p41 = scmp.eq.s32.totalorder %s24, 1
      %p42 = por %p40, %p41
      %p43 = scmp.ne.s32.totalorder %s32, %s33
      %p44 = scmp.eq.s32.totalorder %s24, 0
      %p45 = por %p43, %p44
      %p46 = scmp.ne.s32.totalorder %s32, %s33
      %p47 = scmp.eq.s32.totalorder %s25, 1
      %p48 = por %p46, %p47
      %p50 = scmp.ne.s32.totalorder %s33, %s49
      %p51 = scmp.eq.s32.totalorder %s25, 0
      %p52 = por %p50, %p51
      %s54 = sadd.s32 %s53, 1
      %p57 = scmp.eq.s32.totalorder %s19, 1
      %p58 = scmp.ne.s32.totalorder %s53, %s55
      %p59 = scmp.eq.s32.totalorder %s19, 0
      %p60 = por %p58, %p59
      %p61 = scmp.ne.s32.totalorder %s53, %s55
      %p62 = scmp.eq.s32.totalorder %s24, 1
      %p63 = por %p61, %p62
      %p64 = scmp.ne.s32.totalorder %s55, %s56
      %p65 = scmp.eq.s32.totalorder %s24, 0
      %p66 = por %p64, %p65
      %p67 = scmp.ne.s32.totalorder %s55, %s56
      %p68 = scmp.eq.s32.totalorder %s25, 1
      %p69 = por %p67, %p68
      %p71 = scmp.ne.s32.totalorder %s56, %s70
      %p72 = scmp.eq.s32.totalorder %s25, 0
      %p73 = por %p71, %p72
      %s75 = sadd.s32 %s74, 1
      %p78 = scmp.eq.s32.totalorder %s19, 1
      %p79 = scmp.ne.s32.totalorder %s74, %s76
      %p80 = scmp.eq.s32.totalorder %s19, 0
      %p81 = por %p79, %p80
      %p82 = scmp.ne.s32.totalorder %s74, %s76
      %p83 = scmp.eq.s32.totalorder %s24, 1
      %p84 = por %p82, %p83
      %p85 = scmp.ne.s32.totalorder %s76, %s77
      %p86 = scmp.eq.s32.totalorder %s24, 0
      %p87 = por %p85, %p86
      %p88 = scmp.ne.s32.totalorder %s76, %s77
      %p89 = scmp.eq.s32.totalorder %s25, 1
      %p90 = por %p88, %p89
      %p92 = scmp.ne.s32.totalorder %s77, %s91
      %p93 = scmp.eq.s32.totalorder %s25, 0
      %p94 = por %p92, %p93
      %s96 = sadd.s32 %s95, 1
      %p99 = scmp.eq.s32.totalorder %s19, 1
      %p100 = scmp.ne.s32.totalorder %s95, %s97
      %p101 = scmp.eq.s32.totalorder %s19, 0
      %p102 = por %p100, %p101
      %p103 = scmp.ne.s32.totalorder %s95, %s97
      %p104 = scmp.eq.s32.totalorder %s24, 1
      %p105 = por %p103, %p104
      %p106 = scmp.ne.s32.totalorder %s97, %s98
      %p107 = scmp.eq.s32.totalorder %s24, 0
      %p108 = por %p106, %p107
      %p109 = scmp.ne.s32.totalorder %s97, %s98
      %p110 = scmp.eq.s32.totalorder %s25, 1
      %p111 = por %p109, %p110
      %p113 = scmp.ne.s32.totalorder %s98, %s112
      %p114 = scmp.eq.s32.totalorder %s25, 0
      %p115 = por %p113, %p114
      %s117 = sadd.s32 %s116, 1
      %p120 = scmp.eq.s32.totalorder %s19, 1
      %p121 = scmp.ne.s32.totalorder %s116, %s118
      %p122 = scmp.eq.s32.totalorder %s19, 0
      %p123 = por %p121, %p122
      %p124 = scmp.ne.s32.totalorder %s116, %s118
      %p125 = scmp.eq.s32.totalorder %s24, 1
      %p126 = por %p124, %p125
      %p127 = scmp.ne.s32.totalorder %s118, %s119
      %p128 = scmp.eq.s32.totalorder %s24, 0
      %p129 = por %p127, %p128
      %p130 = scmp.ne.s32.totalorder %s118, %s119
      %p131 = scmp.eq.s32.totalorder %s25, 1
      %p132 = por %p130, %p131
      %p134 = scmp.ne.s32.totalorder %s119, %s133
      %p135 = scmp.eq.s32.totalorder %s25, 0
      %p136 = por %p134, %p135
      %s137 = ssub.s32 %s19, %s26
      %p138 = scmp.eq.s32.totalorder %s137, 0
      %s140 = sadd.s32 %s139, 1
      %s141 = scalar_select %p138, %s139, %s140
      %p144 = pneg %p138
      %p145 = scmp.eq.s32.totalorder %s19, 1
      %p146 = por %p144, %p145
      %p147 = scmp.ne.s32.totalorder %s139, %s142
      %p148 = scmp.eq.s32.totalorder %s19, 0
      %p149 = por %p147, %p148
      %p150 = scmp.ne.s32.totalorder %s139, %s142
      %p151 = scmp.eq.s32.totalorder %s24, 1
      %p152 = por %p150, %p151
      %p153 = scmp.ne.s32.totalorder %s142, %s143
      %p154 = scmp.eq.s32.totalorder %s24, 0
      %p155 = por %p153, %p154
      %p156 = scmp.ne.s32.totalorder %s142, %s143
      %p157 = scmp.eq.s32.totalorder %s25, 1
      %p158 = por %p156, %p157
      %p160 = scmp.ne.s32.totalorder %s143, %s159
      %p161 = scmp.eq.s32.totalorder %s25, 0
      %p162 = por %p160, %p161
      %s163 = ssub.s32 %s19, %s26
      %p164 = scmp.eq.s32.totalorder %s163, 0
      %s166 = sadd.s32 %s165, 1
      %s167 = scalar_select %p164, %s165, %s166
      %p170 = pneg %p164
      %p171 = scmp.eq.s32.totalorder %s19, 1
      %p172 = por %p170, %p171
      %p173 = scmp.ne.s32.totalorder %s165, %s168
      %p174 = scmp.eq.s32.totalorder %s19, 0
      %p175 = por %p173, %p174
      %p176 = scmp.ne.s32.totalorder %s165, %s168
      %p177 = scmp.eq.s32.totalorder %s24, 1
      %p178 = por %p176, %p177
      %p179 = scmp.ne.s32.totalorder %s168, %s169
      %p180 = scmp.eq.s32.totalorder %s24, 0
      %p181 = por %p179, %p180
      %p182 = scmp.ne.s32.totalorder %s168, %s169
      %p183 = scmp.eq.s32.totalorder %s25, 1
      %p184 = por %p182, %p183
      %p186 = scmp.ne.s32.totalorder %s169, %s185
      %p187 = scmp.eq.s32.totalorder %s25, 0
      %p188 = por %p186, %p187
      %p189 = scmp.le.s32.totalorder 1, %s19
      %p190 = scmp.lt.s32.totalorder %s19, 3
      %p191 = pnand %p189, %p190
      %p192 = pneg %p191
      // Predicated region
      $region9: #{tpu_custom_call.1} parent=5 // pred_check
        _
      $region10: #{tpu_custom_call.1} parent=5 // pred_check_branch
        %194 = sbr.rel (%p191) target = $region12
      $region11: #{tpu_custom_call.1} parent=5 // pred_region
        %s195 = ssub.s32 %s19, 1
        // Predicated region
        $region13: #{tpu_custom_call.1} parent=11 // pred_check
          %p196 = pneg %p66
        $region14: #{tpu_custom_call.1} parent=11 // pred_check_branch
          %198 = sbr.rel (%p196) target = $region16
        $region15: #{tpu_custom_call.1} parent=11 // pred_region
          _
        $region16: #{tpu_custom_call.1} parent=11 // pred_fallthru
          _
        // Predicated region
        $region17: #{tpu_custom_call.1} parent=11 // pred_check
          %p199 = pneg %p87
        $region18: #{tpu_custom_call.1} parent=11 // pred_check_branch
          %201 = sbr.rel (%p199) target = $region20
        $region19: #{tpu_custom_call.1} parent=11 // pred_region
          _
        $region20: #{tpu_custom_call.1} parent=11 // pred_fallthru
          _
        // Predicated region
        $region21: #{tpu_custom_call.1} parent=11 // pred_check
          %p202 = pneg %p108
        $region22: #{tpu_custom_call.1} parent=11 // pred_check_branch
          %204 = sbr.rel (%p202) target = $region24
        $region23: #{tpu_custom_call.1} parent=11 // pred_region
          _
        $region24: #{tpu_custom_call.1} parent=11 // pred_fallthru
          _
        // Predicated region
        $region25: #{tpu_custom_call.1} parent=11 // pred_check
          %p205 = pneg %p129
        $region26: #{tpu_custom_call.1} parent=11 // pred_check_branch
          %207 = sbr.rel (%p205) target = $region28
        $region27: #{tpu_custom_call.1} parent=11 // pred_region
          _
        $region28: #{tpu_custom_call.1} parent=11 // pred_fallthru
          _
      $region12: #{tpu_custom_call.1} parent=5 // pred_fallthru
        _
      %p208 = scmp.lt.s32.totalorder %s19, 2
      // Predicated region
      $region29: #{tpu_custom_call.1} parent=5 // pred_check
        %p209 = pneg %p208
      $region30: #{tpu_custom_call.1} parent=5 // pred_check_branch
        %211 = sbr.rel (%p209) target = $region32
      $region31: #{tpu_custom_call.1} parent=5 // pred_region
        // Predicated region
        $region33: #{tpu_custom_call.1} parent=31 // pred_check
          %p212 = pneg %p39
        $region34: #{tpu_custom_call.1} parent=31 // pred_check_branch
          %214 = sbr.rel (%p212) target = $region36
        $region35: #{tpu_custom_call.1} parent=31 // pred_region
          %p215 = scmp.lt.s32.totalorder %s19, 1
          %s216 = scalar_select %p215, %s19, 1
          %s217 = smul.addr %s216, 8
          %s218 = scalar_lea.vmem %s0, %s217
        $region36: #{tpu_custom_call.1} parent=31 // pred_fallthru
          _
      $region32: #{tpu_custom_call.1} parent=5 // pred_fallthru
        _
      %p219 = scmp.le.s32.totalorder 1, %s19
      %p220 = scmp.lt.s32.totalorder %s19, 3
      %p221 = pnand %p219, %p220
      %p222 = pneg %p221
      // Predicated region
      $region37: #{tpu_custom_call.1} parent=5 // pred_check
        _
      $region38: #{tpu_custom_call.1} parent=5 // pred_check_branch
        %224 = sbr.rel (%p221) target = $region40
      $region39: #{tpu_custom_call.1} parent=5 // pred_region
        %s225 = ssub.s32 %s19, 1
        %p226 = scmp.lt.s32.totalorder %s24, 1
        %s227 = scalar_select %p226, %s24, 1
        %s228 = smul.addr %s227, 8
        %s229 = scalar_lea.vmem %s0, %s228
        %p230 = pneg %p45
        %p231 = pneg %p42
        %p232 = pneg %p66
        %p233 = pneg %p63
        %p234 = pneg %p87
        %p235 = pneg %p84
        %p236 = pneg %p108
        %p237 = pneg %p105
        %p238 = pneg %p129
        %p239 = pneg %p126
        %p240 = pneg %p155
        %p241 = pneg %p152
        %s242 = sand.u32 %s142, 1
        %s243 = scalar_lea.sflag [#allocation3], %s242
        %s244 = sand.u32 %s142, 1
        %s245 = smul.addr %s244, 4
        %s246 = scalar_lea.vmem [#allocation2], %s245
        %p247 = pneg %p181
        %p248 = pneg %p178
        %s249 = sand.u32 %s168, 1
        %s250 = scalar_lea.sflag [#allocation5], %s249
        %s251 = sand.u32 %s168, 1
        %s252 = scalar_lea.vmem [#allocation4], %s251
        %p253 = scmp.lt.s32.totalorder %s24, 1
        %s254 = scalar_select %p253, %s24, 1
        %s255 = smul.addr %s254, 8
        %s256 = scalar_lea.vmem %s0, %s255
        %v258 = vld [vmem:[%s256] sm:$0xff]
        %v259 = vld [vmem:[%s1] sm:$0xf]
        %v260 = vld [vmem:[%s1 + $0x4] sm:$0xf]
        %v261 = vld [vmem:[%s1 + $0x8] sm:$0xf]
        %v262 = vld [vmem:[%s1 + $0xc] sm:$0xf]
        %v263 = vld [vmem:[%s1 + $0x10] sm:$0xf]
        %v264 = vld [vmem:[%s1 + $0x14] sm:$0xf]
        %v265 = vld [vmem:[%s1 + $0x18] sm:$0xf]
        %v266 = vld [vmem:[%s1 + $0x1c] sm:$0xf]
        %v267 = vld [vmem:[%s1 + $0x20] sm:$0xf]
        %v268 = vld [vmem:[%s1 + $0x24] sm:$0xf]
        %v269 = vld [vmem:[%s1 + $0x28] sm:$0xf]
        %v270 = vld [vmem:[%s1 + $0x2c] sm:$0xf]
        %v271 = vld [vmem:[%s1 + $0x30] sm:$0xf]
        %v272 = vld [vmem:[%s1 + $0x34] sm:$0xf]
        %v273 = vld [vmem:[%s1 + $0x38] sm:$0xf]
        %v274 = vld [vmem:[%s1 + $0x3c] sm:$0xf]
        %v275 = vld [vmem:[%s1 + $0x40] sm:$0xf]
        %v276 = vld [vmem:[%s1 + $0x44] sm:$0xf]
        %v277 = vld [vmem:[%s1 + $0x48] sm:$0xf]
        %v278 = vld [vmem:[%s1 + $0x4c] sm:$0xf]
        %v279 = vld [vmem:[%s1 + $0x50] sm:$0xf]
        %v280 = vld [vmem:[%s1 + $0x54] sm:$0xf]
        %v281 = vld [vmem:[%s1 + $0x58] sm:$0xf]
        %v282 = vld [vmem:[%s1 + $0x5c] sm:$0xf]
        %v283 = vld [vmem:[%s1 + $0x60] sm:$0xf]
        %v284 = vld [vmem:[%s1 + $0x64] sm:$0xf]
        %v285 = vld [vmem:[%s1 + $0x68] sm:$0xf]
        %v286 = vld [vmem:[%s1 + $0x6c] sm:$0xf]
        %v287 = vld [vmem:[%s1 + $0x70] sm:$0xf]
        %v288 = vld [vmem:[%s1 + $0x74] sm:$0xf]
        %v289 = vld [vmem:[%s1 + $0x78] sm:$0xf]
        %v290 = vld [vmem:[%s1 + $0x7c] sm:$0xf]
        %v291 = vld [vmem:[%s1 + $0x80] sm:$0xf]
        %v292 = vld [vmem:[%s1 + $0x84] sm:$0xf]
        %v293 = vld [vmem:[%s1 + $0x88] sm:$0xf]
        %v294 = vld [vmem:[%s1 + $0x8c] sm:$0xf]
        %v295 = vld [vmem:[%s1 + $0x90] sm:$0xf]
        %v296 = vld [vmem:[%s1 + $0x94] sm:$0xf]
        %v297 = vld [vmem:[%s1 + $0x98] sm:$0xf]
        %v298 = vld [vmem:[%s1 + $0x9c] sm:$0xf]
        %v299 = vld [vmem:[%s1 + $0xa0] sm:$0xf]
        %v300 = vld [vmem:[%s1 + $0xa4] sm:$0xf]
        %v301 = vld [vmem:[%s1 + $0xa8] sm:$0xf]
        %v302 = vld [vmem:[%s1 + $0xac] sm:$0xf]
        %v303 = vld [vmem:[%s1 + $0xb0] sm:$0xf]
        %v304 = vld [vmem:[%s1 + $0xb4] sm:$0xf]
        %v305 = vld [vmem:[%s1 + $0xb8] sm:$0xf]
        %v306 = vld [vmem:[%s1 + $0xbc] sm:$0xf]
        %v307 = vld [vmem:[%s1 + $0xc0] sm:$0xf]
        %v308 = vld [vmem:[%s1 + $0xc4] sm:$0xf]
        %v309 = vld [vmem:[%s1 + $0xc8] sm:$0xf]
        %v310 = vld [vmem:[%s1 + $0xcc] sm:$0xf]
        %v311 = vld [vmem:[%s1 + $0xd0] sm:$0xf]
        %v312 = vld [vmem:[%s1 + $0xd4] sm:$0xf]
        %v313 = vld [vmem:[%s1 + $0xd8] sm:$0xf]
        %v314 = vld [vmem:[%s1 + $0xdc] sm:$0xf]
        %v315 = vld [vmem:[%s1 + $0xe0] sm:$0xf]
        %v316 = vld [vmem:[%s1 + $0xe4] sm:$0xf]
        %v317 = vld [vmem:[%s1 + $0xe8] sm:$0xf]
        %v318 = vld [vmem:[%s1 + $0xec] sm:$0xf]
        %v319 = vld [vmem:[%s1 + $0xf0] sm:$0xf]
        %v320 = vld [vmem:[%s1 + $0xf4] sm:$0xf]
        %v321 = vld [vmem:[%s1 + $0xf8] sm:$0xf]
        %v322 = vld [vmem:[%s1 + $0xfc] sm:$0xf]
        %v323 = vpack.c.bf16 %v258, %v258
        %v324 = vld [vmem:[%s2] sm:$0xff]
        %v325 = vld [vmem:[%s2 + $0x8] sm:$0xff]
        %v326 = vld [vmem:[%s2 + $0x10] sm:$0xff]
        %v327 = vld [vmem:[%s2 + $0x18] sm:$0xff]
        %v328 = vld [vmem:[%s2 + $0x20] sm:$0xff]
        %v329 = vld [vmem:[%s2 + $0x28] sm:$0xff]
        %v330 = vld [vmem:[%s2 + $0x30] sm:$0xff]
        %v331 = vld [vmem:[%s2 + $0x38] sm:$0xff]
        %v332 = vld [vmem:[%s2 + $0x40] sm:$0xff]
        %v333 = vld [vmem:[%s2 + $0x48] sm:$0xff]
        %v334 = vld [vmem:[%s2 + $0x50] sm:$0xff]
        %v335 = vld [vmem:[%s2 + $0x58] sm:$0xff]
        %v336 = vld [vmem:[%s2 + $0x60] sm:$0xff]
        %v337 = vld [vmem:[%s2 + $0x68] sm:$0xff]
        %v338 = vld [vmem:[%s2 + $0x70] sm:$0xff]
        %v339 = vld [vmem:[%s2 + $0x78] sm:$0xff]
        %v340 = vld [vmem:[%s2 + $0x80] sm:$0xff]
        %v341 = vld [vmem:[%s2 + $0x88] sm:$0xff]
        %v342 = vld [vmem:[%s2 + $0x90] sm:$0xff]
        %v343 = vld [vmem:[%s2 + $0x98] sm:$0xff]
        %v344 = vld [vmem:[%s2 + $0xa0] sm:$0xff]
        %v345 = vld [vmem:[%s2 + $0xa8] sm:$0xff]
        %v346 = vld [vmem:[%s2 + $0xb0] sm:$0xff]
        %v347 = vld [vmem:[%s2 + $0xb8] sm:$0xff]
        %v348 = vld [vmem:[%s2 + $0xc0] sm:$0xff]
        %v349 = vld [vmem:[%s2 + $0xc8] sm:$0xff]
        %v350 = vld [vmem:[%s2 + $0xd0] sm:$0xff]
        %v351 = vld [vmem:[%s2 + $0xd8] sm:$0xff]
        %v352 = vld [vmem:[%s2 + $0xe0] sm:$0xff]
        %v353 = vld [vmem:[%s2 + $0xe8] sm:$0xff]
        %v354 = vld [vmem:[%s2 + $0xf0] sm:$0xff]
        %v355 = vld [vmem:[%s2 + $0xf8] sm:$0xff]
        %v356 = vld [vmem:[%s2 + $0x100] sm:$0xff]
        %v357 = vld [vmem:[%s2 + $0x108] sm:$0xff]
        %v358 = vld [vmem:[%s2 + $0x110] sm:$0xff]
        %v359 = vld [vmem:[%s2 + $0x118] sm:$0xff]
        %v360 = vld [vmem:[%s2 + $0x120] sm:$0xff]
        %v361 = vld [vmem:[%s2 + $0x128] sm:$0xff]
        %v362 = vld [vmem:[%s2 + $0x130] sm:$0xff]
        %v363 = vld [vmem:[%s2 + $0x138] sm:$0xff]
        %v364 = vld [vmem:[%s2 + $0x140] sm:$0xff]
        %v365 = vld [vmem:[%s2 + $0x148] sm:$0xff]
        %v366 = vld [vmem:[%s2 + $0x150] sm:$0xff]
        %v367 = vld [vmem:[%s2 + $0x158] sm:$0xff]
        %v368 = vld [vmem:[%s2 + $0x160] sm:$0xff]
        %v369 = vld [vmem:[%s2 + $0x168] sm:$0xff]
        %v370 = vld [vmem:[%s2 + $0x170] sm:$0xff]
        %v371 = vld [vmem:[%s2 + $0x178] sm:$0xff]
        %v372 = vld [vmem:[%s2 + $0x180] sm:$0xff]
        %v373 = vld [vmem:[%s2 + $0x188] sm:$0xff]
        %v374 = vld [vmem:[%s2 + $0x190] sm:$0xff]
        %v375 = vld [vmem:[%s2 + $0x198] sm:$0xff]
        %v376 = vld [vmem:[%s2 + $0x1a0] sm:$0xff]
        %v377 = vld [vmem:[%s2 + $0x1a8] sm:$0xff]
        %v378 = vld [vmem:[%s2 + $0x1b0] sm:$0xff]
        %v379 = vld [vmem:[%s2 + $0x1b8] sm:$0xff]
        %v380 = vld [vmem:[%s2 + $0x1c0] sm:$0xff]
        %v381 = vld [vmem:[%s2 + $0x1c8] sm:$0xff]
        %v382 = vld [vmem:[%s2 + $0x1d0] sm:$0xff]
        %v383 = vld [vmem:[%s2 + $0x1d8] sm:$0xff]
        %v384 = vld [vmem:[%s2 + $0x1e0] sm:$0xff]
        %v385 = vld [vmem:[%s2 + $0x1e8] sm:$0xff]
        %v386 = vld [vmem:[%s2 + $0x1f0] sm:$0xff]
        %v387 = vld [vmem:[%s2 + $0x1f8] sm:$0xff]
        %389 = vset.pattern.permute.xlu0 0
        %390 = vperm.xlu0 %389, %v324
        %v391 = vpop.permute.xlu0 %390
        %394 = vset.pattern.permute.xlu0 0
        %395 = vperm.xlu0 %394, %v325
        %v396 = vpop.permute.xlu0 %395
        %399 = vset.pattern.permute.xlu0 0
        %400 = vperm.xlu0 %399, %v326
        %v401 = vpop.permute.xlu0 %400
        %404 = vset.pattern.permute.xlu0 0
        %405 = vperm.xlu0 %404, %v327
        %v406 = vpop.permute.xlu0 %405
        %409 = vset.pattern.permute.xlu0 0
        %410 = vperm.xlu0 %409, %v328
        %v411 = vpop.permute.xlu0 %410
        %414 = vset.pattern.permute.xlu0 0
        %415 = vperm.xlu0 %414, %v329
        %v416 = vpop.permute.xlu0 %415
        %419 = vset.pattern.permute.xlu0 0
        %420 = vperm.xlu0 %419, %v330
        %v421 = vpop.permute.xlu0 %420
        %424 = vset.pattern.permute.xlu0 0
        %425 = vperm.xlu0 %424, %v331
        %v426 = vpop.permute.xlu0 %425
        %429 = vset.pattern.permute.xlu0 0
        %430 = vperm.xlu0 %429, %v332
        %v431 = vpop.permute.xlu0 %430
        %434 = vset.pattern.permute.xlu0 0
        %435 = vperm.xlu0 %434, %v333
        %v436 = vpop.permute.xlu0 %435
        %439 = vset.pattern.permute.xlu0 0
        %440 = vperm.xlu0 %439, %v334
        %v441 = vpop.permute.xlu0 %440
        %444 = vset.pattern.permute.xlu0 0
        %445 = vperm.xlu0 %444, %v335
        %v446 = vpop.permute.xlu0 %445
        %449 = vset.pattern.permute.xlu0 0
        %450 = vperm.xlu0 %449, %v336
        %v451 = vpop.permute.xlu0 %450
        %454 = vset.pattern.permute.xlu0 0
        %455 = vperm.xlu0 %454, %v337
        %v456 = vpop.permute.xlu0 %455
        %459 = vset.pattern.permute.xlu0 0
        %460 = vperm.xlu0 %459, %v338
        %v461 = vpop.permute.xlu0 %460
        %464 = vset.pattern.permute.xlu0 0
        %465 = vperm.xlu0 %464, %v339
        %v466 = vpop.permute.xlu0 %465
        %469 = vset.pattern.permute.xlu0 0
        %470 = vperm.xlu0 %469, %v340
        %v471 = vpop.permute.xlu0 %470
        %474 = vset.pattern.permute.xlu0 0
        %475 = vperm.xlu0 %474, %v341
        %v476 = vpop.permute.xlu0 %475
        %479 = vset.pattern.permute.xlu0 0
        %480 = vperm.xlu0 %479, %v342
        %v481 = vpop.permute.xlu0 %480
        %484 = vset.pattern.permute.xlu0 0
        %485 = vperm.xlu0 %484, %v343
        %v486 = vpop.permute.xlu0 %485
        %489 = vset.pattern.permute.xlu0 0
        %490 = vperm.xlu0 %489, %v344
        %v491 = vpop.permute.xlu0 %490
        %494 = vset.pattern.permute.xlu0 0
        %495 = vperm.xlu0 %494, %v345
        %v496 = vpop.permute.xlu0 %495
        %499 = vset.pattern.permute.xlu0 0
        %500 = vperm.xlu0 %499, %v346
        %v501 = vpop.permute.xlu0 %500
        %504 = vset.pattern.permute.xlu0 0
        %505 = vperm.xlu0 %504, %v347
        %v506 = vpop.permute.xlu0 %505
        %509 = vset.pattern.permute.xlu0 0
        %510 = vperm.xlu0 %509, %v348
        %v511 = vpop.permute.xlu0 %510
        %514 = vset.pattern.permute.xlu0 0
        %515 = vperm.xlu0 %514, %v349
        %v516 = vpop.permute.xlu0 %515
        %519 = vset.pattern.permute.xlu0 0
        %520 = vperm.xlu0 %519, %v350
        %v521 = vpop.permute.xlu0 %520
        %524 = vset.pattern.permute.xlu0 0
        %525 = vperm.xlu0 %524, %v351
        %v526 = vpop.permute.xlu0 %525
        %529 = vset.pattern.permute.xlu0 0
        %530 = vperm.xlu0 %529, %v352
        %v531 = vpop.permute.xlu0 %530
        %534 = vset.pattern.permute.xlu0 0
        %535 = vperm.xlu0 %534, %v353
        %v536 = vpop.permute.xlu0 %535
        %539 = vset.pattern.permute.xlu0 0
        %540 = vperm.xlu0 %539, %v354
        %v541 = vpop.permute.xlu0 %540
        %544 = vset.pattern.permute.xlu0 0
        %545 = vperm.xlu0 %544, %v355
        %v546 = vpop.permute.xlu0 %545
        %549 = vset.pattern.permute.xlu0 0
        %550 = vperm.xlu0 %549, %v356
        %v551 = vpop.permute.xlu0 %550
        %554 = vset.pattern.permute.xlu0 0
        %555 = vperm.xlu0 %554, %v357
        %v556 = vpop.permute.xlu0 %555
        %559 = vset.pattern.permute.xlu0 0
        %560 = vperm.xlu0 %559, %v358
        %v561 = vpop.permute.xlu0 %560
        %564 = vset.pattern.permute.xlu0 0
        %565 = vperm.xlu0 %564, %v359
        %v566 = vpop.permute.xlu0 %565
        %569 = vset.pattern.permute.xlu0 0
        %570 = vperm.xlu0 %569, %v360
        %v571 = vpop.permute.xlu0 %570
        %574 = vset.pattern.permute.xlu0 0
        %575 = vperm.xlu0 %574, %v361
        %v576 = vpop.permute.xlu0 %575
        %579 = vset.pattern.permute.xlu0 0
        %580 = vperm.xlu0 %579, %v362
        %v581 = vpop.permute.xlu0 %580
        %584 = vset.pattern.permute.xlu0 0
        %585 = vperm.xlu0 %584, %v363
        %v586 = vpop.permute.xlu0 %585
        %589 = vset.pattern.permute.xlu0 0
        %590 = vperm.xlu0 %589, %v364
        %v591 = vpop.permute.xlu0 %590
        %594 = vset.pattern.permute.xlu0 0
        %595 = vperm.xlu0 %594, %v365
        %v596 = vpop.permute.xlu0 %595
        %599 = vset.pattern.permute.xlu0 0
        %600 = vperm.xlu0 %599, %v366
        %v601 = vpop.permute.xlu0 %600
        %604 = vset.pattern.permute.xlu0 0
        %605 = vperm.xlu0 %604, %v367
        %v606 = vpop.permute.xlu0 %605
        %609 = vset.pattern.permute.xlu0 0
        %610 = vperm.xlu0 %609, %v368
        %v611 = vpop.permute.xlu0 %610
        %614 = vset.pattern.permute.xlu0 0
        %615 = vperm.xlu0 %614, %v369
        %v616 = vpop.permute.xlu0 %615
        %619 = vset.pattern.permute.xlu0 0
        %620 = vperm.xlu0 %619, %v370
        %v621 = vpop.permute.xlu0 %620
        %624 = vset.pattern.permute.xlu0 0
        %625 = vperm.xlu0 %624, %v371
        %v626 = vpop.permute.xlu0 %625
        %629 = vset.pattern.permute.xlu0 0
        %630 = vperm.xlu0 %629, %v372
        %v631 = vpop.permute.xlu0 %630
        %634 = vset.pattern.permute.xlu0 0
        %635 = vperm.xlu0 %634, %v373
        %v636 = vpop.permute.xlu0 %635
        %639 = vset.pattern.permute.xlu0 0
        %640 = vperm.xlu0 %639, %v374
        %v641 = vpop.permute.xlu0 %640
        %644 = vset.pattern.permute.xlu0 0
        %645 = vperm.xlu0 %644, %v375
        %v646 = vpop.permute.xlu0 %645
        %649 = vset.pattern.permute.xlu0 0
        %650 = vperm.xlu0 %649, %v376
        %v651 = vpop.permute.xlu0 %650
        %654 = vset.pattern.permute.xlu0 0
        %655 = vperm.xlu0 %654, %v377
        %v656 = vpop.permute.xlu0 %655
        %659 = vset.pattern.permute.xlu0 0
        %660 = vperm.xlu0 %659, %v378
        %v661 = vpop.permute.xlu0 %660
        %664 = vset.pattern.permute.xlu0 0
        %665 = vperm.xlu0 %664, %v379
        %v666 = vpop.permute.xlu0 %665
        %669 = vset.pattern.permute.xlu0 0
        %670 = vperm.xlu0 %669, %v380
        %v671 = vpop.permute.xlu0 %670
        %674 = vset.pattern.permute.xlu0 0
        %675 = vperm.xlu0 %674, %v381
        %v676 = vpop.permute.xlu0 %675
        %679 = vset.pattern.permute.xlu0 0
        %680 = vperm.xlu0 %679, %v382
        %v681 = vpop.permute.xlu0 %680
        %684 = vset.pattern.permute.xlu0 0
        %685 = vperm.xlu0 %684, %v383
        %v686 = vpop.permute.xlu0 %685
        %689 = vset.pattern.permute.xlu0 0
        %690 = vperm.xlu0 %689, %v384
        %v691 = vpop.permute.xlu0 %690
        %694 = vset.pattern.permute.xlu0 0
        %695 = vperm.xlu0 %694, %v385
        %v696 = vpop.permute.xlu0 %695
        %699 = vset.pattern.permute.xlu0 0
        %700 = vperm.xlu0 %699, %v386
        %v701 = vpop.permute.xlu0 %700
        %704 = vset.pattern.permute.xlu0 0
        %705 = vperm.xlu0 %704, %v387
        %v706 = vpop.permute.xlu0 %705
        %v772 = vunpack.c.l.b16 %v259
        %v773 = vunpack.c.l.b16 %v260
        %v774 = vunpack.c.l.b16 %v261
        %v775 = vunpack.c.l.b16 %v262
        %v776 = vunpack.c.l.b16 %v263
        %v777 = vunpack.c.l.b16 %v264
        %v778 = vunpack.c.l.b16 %v265
        %v779 = vunpack.c.l.b16 %v266
        %v780 = vunpack.c.l.b16 %v267
        %v781 = vunpack.c.l.b16 %v268
        %v782 = vunpack.c.l.b16 %v269
        %v783 = vunpack.c.l.b16 %v270
        %v784 = vunpack.c.l.b16 %v271
        %v785 = vunpack.c.l.b16 %v272
        %v786 = vunpack.c.l.b16 %v273
        %v787 = vunpack.c.l.b16 %v274
        %v788 = vunpack.c.l.b16 %v275
        %v789 = vunpack.c.l.b16 %v276
        %v790 = vunpack.c.l.b16 %v277
        %v791 = vunpack.c.l.b16 %v278
        %v792 = vunpack.c.l.b16 %v279
        %v793 = vunpack.c.l.b16 %v280
        %v794 = vunpack.c.l.b16 %v281
        %v795 = vunpack.c.l.b16 %v282
        %v796 = vunpack.c.l.b16 %v283
        %v797 = vunpack.c.l.b16 %v284
        %v798 = vunpack.c.l.b16 %v285
        %v799 = vunpack.c.l.b16 %v286
        %v800 = vunpack.c.l.b16 %v287
        %v801 = vunpack.c.l.b16 %v288
        %v802 = vunpack.c.l.b16 %v289
        %v803 = vunpack.c.l.b16 %v290
        %v804 = vunpack.c.l.b16 %v291
        %v805 = vunpack.c.l.b16 %v292
        %v806 = vunpack.c.l.b16 %v293
        %v807 = vunpack.c.l.b16 %v294
        %v808 = vunpack.c.l.b16 %v295
        %v809 = vunpack.c.l.b16 %v296
        %v810 = vunpack.c.l.b16 %v297
        %v811 = vunpack.c.l.b16 %v298
        %v812 = vunpack.c.l.b16 %v299
        %v813 = vunpack.c.l.b16 %v300
        %v814 = vunpack.c.l.b16 %v301
        %v815 = vunpack.c.l.b16 %v302
        %v816 = vunpack.c.l.b16 %v303
        %v817 = vunpack.c.l.b16 %v304
        %v818 = vunpack.c.l.b16 %v305
        %v819 = vunpack.c.l.b16 %v306
        %v820 = vunpack.c.l.b16 %v307
        %v821 = vunpack.c.l.b16 %v308
        %v822 = vunpack.c.l.b16 %v309
        %v823 = vunpack.c.l.b16 %v310
        %v824 = vunpack.c.l.b16 %v311
        %v825 = vunpack.c.l.b16 %v312
        %v826 = vunpack.c.l.b16 %v313
        %v827 = vunpack.c.l.b16 %v314
        %v828 = vunpack.c.l.b16 %v315
        %v829 = vunpack.c.l.b16 %v316
        %v830 = vunpack.c.l.b16 %v317
        %v831 = vunpack.c.l.b16 %v318
        %v832 = vunpack.c.l.b16 %v319
        %v833 = vunpack.c.l.b16 %v320
        %v834 = vunpack.c.l.b16 %v321
        %v835 = vunpack.c.l.b16 %v322
        %v836 = vpack.c.b16 %v773, %v772
        %v837 = vpack.c.b16 %v775, %v774
        %v838 = vpack.c.b16 %v777, %v776
        %v839 = vpack.c.b16 %v779, %v778
        %v840 = vpack.c.b16 %v781, %v780
        %v841 = vpack.c.b16 %v783, %v782
        %v842 = vpack.c.b16 %v785, %v784
        %v843 = vpack.c.b16 %v787, %v786
        %v844 = vpack.c.b16 %v789, %v788
        %v845 = vpack.c.b16 %v791, %v790
        %v846 = vpack.c.b16 %v793, %v792
        %v847 = vpack.c.b16 %v795, %v794
        %v848 = vpack.c.b16 %v797, %v796
        %v849 = vpack.c.b16 %v799, %v798
        %v850 = vpack.c.b16 %v801, %v800
        %v851 = vpack.c.b16 %v803, %v802
        %v852 = vpack.c.b16 %v805, %v804
        %v853 = vpack.c.b16 %v807, %v806
        %v854 = vpack.c.b16 %v809, %v808
        %v855 = vpack.c.b16 %v811, %v810
        %v856 = vpack.c.b16 %v813, %v812
        %v857 = vpack.c.b16 %v815, %v814
        %v858 = vpack.c.b16 %v817, %v816
        %v859 = vpack.c.b16 %v819, %v818
        %v860 = vpack.c.b16 %v821, %v820
        %v861 = vpack.c.b16 %v823, %v822
        %v862 = vpack.c.b16 %v825, %v824
        %v863 = vpack.c.b16 %v827, %v826
        %v864 = vpack.c.b16 %v829, %v828
        %v865 = vpack.c.b16 %v831, %v830
        %v866 = vpack.c.b16 %v833, %v832
        %v867 = vpack.c.b16 %v835, %v834
        %vm868 = vcmask 39936
        %v870 = vsel %vm868, %v836, 0
        %v873 = vsel %vm868, %v837, 0
        %v876 = vsel %vm868, %v838, 0
        %v879 = vsel %vm868, %v839, 0
        %v882 = vsel %vm868, %v840, 0
        %v885 = vsel %vm868, %v841, 0
        %v888 = vsel %vm868, %v842, 0
        %v891 = vsel %vm868, %v843, 0
        %v894 = vsel %vm868, %v844, 0
        %v897 = vsel %vm868, %v845, 0
        %v900 = vsel %vm868, %v846, 0
        %v903 = vsel %vm868, %v847, 0
        %v906 = vsel %vm868, %v848, 0
        %v909 = vsel %vm868, %v849, 0
        %v912 = vsel %vm868, %v850, 0
        %v915 = vsel %vm868, %v851, 0
        %v918 = vsel %vm868, %v852, 0
        %v921 = vsel %vm868, %v853, 0
        %v924 = vsel %vm868, %v854, 0
        %v927 = vsel %vm868, %v855, 0
        %v930 = vsel %vm868, %v856, 0
        %v933 = vsel %vm868, %v857, 0
        %v936 = vsel %vm868, %v858, 0
        %v939 = vsel %vm868, %v859, 0
        %v942 = vsel %vm868, %v860, 0
        %v945 = vsel %vm868, %v861, 0
        %v948 = vsel %vm868, %v862, 0
        %v951 = vsel %vm868, %v863, 0
        %v954 = vsel %vm868, %v864, 0
        %v957 = vsel %vm868, %v865, 0
        %v960 = vsel %vm868, %v866, 0
        %v963 = vsel %vm868, %v867, 0
        %vm965 = vcmask 1041408
        %vm966 = vcmask 1042432
        %v967 = vsel %vm965, 4294967295, 65535
        %v968 = vsel %vm966, %v967, 0
        %v970 = vand.u32 %v323, %v968
        %972 = vmatprep.subr.bf16.mxu0 0
        %973 = vmatpush1.bf16.msra.mxu0 0
        %974 = vmatprep.subr.bf16.mxu0 0
        %975 = vmatpush1.bf16.msra.mxu0 0
        %976 = vmatprep.subr.bf16.mxu0 0
        %977 = vmatpush1.bf16.msra.mxu0 0
        %978 = vmatprep.subr.bf16.mxu0 0
        %979 = vmatpush1.bf16.msra.mxu0 0
        %980 = vmatprep.subr.bf16.mxu0 0
        %981 = vmatpush1.bf16.msra.mxu0 0
        %982 = vmatprep.subr.bf16.mxu0 0
        %983 = vmatpush1.bf16.msra.mxu0 0
        %984 = vmatprep.subr.bf16.mxu0 0
        %985 = vmatpush1.bf16.msra.mxu0 0
        %986 = vmatprep.subr.bf16.mxu0 0
        %987 = vmatpush1.bf16.msra.mxu0 %v970
        %988 = vmatprep.subr.bf16.mxu0 0
        %989 = vmatpush2.bf16.msra.mxu0 0
        %990 = vmatprep.subr.bf16.mxu0 0
        %991 = vmatpush2.bf16.msra.mxu0 0
        %992 = vmatprep.subr.bf16.mxu0 0
        %993 = vmatpush2.bf16.msra.mxu0 0
        %994 = vmatprep.subr.bf16.mxu0 0
        %995 = vmatpush2.bf16.msra.mxu0 0
        %996 = vmatprep.subr.bf16.mxu0 0
        %997 = vmatpush2.bf16.msra.mxu0 0
        %998 = vmatprep.subr.bf16.mxu0 0
        %999 = vmatpush2.bf16.msra.mxu0 0
        %1000 = vmatprep.subr.bf16.mxu0 0
        %1001 = vmatpush2.bf16.msra.mxu0 0
        %1002 = vmatprep.subr.bf16.mxu0 0
        %1003 = vmatpush2.bf16.msra.mxu0 0
        %1004 = vmatprep.mubr.bf16.mxu0 0
        %1005 = vmatmul.mubr.bf16.gmra.mxu0 %v870
        %v1006 = vpop.f32.mrf.mxu0
        %v1007 = vadd.f32 %v391, %v1006
        %v1008 = vpop.f32.mrf.mxu0
        %v1009 = vpop.f32.mrf.mxu0
        %v1010 = vadd.f32 %v396, %v1009
        %v1011 = vpop.f32.mrf.mxu0
        %1012 = vmatprep.mubr.bf16.mxu0 0
        %1013 = vmatmul.mubr.bf16.gmra.mxu0 %v873
        %v1014 = vpop.f32.mrf.mxu0
        %v1015 = vadd.f32 %v401, %v1014
        %v1016 = vpop.f32.mrf.mxu0
        %v1017 = vpop.f32.mrf.mxu0
        %v1018 = vadd.f32 %v406, %v1017
        %v1019 = vpop.f32.mrf.mxu0
        %1020 = vmatprep.mubr.bf16.mxu0 0
        %1021 = vmatmul.mubr.bf16.gmra.mxu0 %v876
        %v1022 = vpop.f32.mrf.mxu0
        %v1023 = vadd.f32 %v411, %v1022
        %v1024 = vpop.f32.mrf.mxu0
        %v1025 = vpop.f32.mrf.mxu0
        %v1026 = vadd.f32 %v416, %v1025
        %v1027 = vpop.f32.mrf.mxu0
        %1028 = vmatprep.mubr.bf16.mxu0 0
        %1029 = vmatmul.mubr.bf16.gmra.mxu0 %v879
        %v1030 = vpop.f32.mrf.mxu0
        %v1031 = vadd.f32 %v421, %v1030
        %v1032 = vpop.f32.mrf.mxu0
        %v1033 = vpop.f32.mrf.mxu0
        %v1034 = vadd.f32 %v426, %v1033
        %v1035 = vpop.f32.mrf.mxu0
        %1036 = vmatprep.mubr.bf16.mxu0 0
        %1037 = vmatmul.mubr.bf16.gmra.mxu0 %v882
        %v1038 = vpop.f32.mrf.mxu0
        %v1039 = vadd.f32 %v431, %v1038
        %v1040 = vpop.f32.mrf.mxu0
        %v1041 = vpop.f32.mrf.mxu0
        %v1042 = vadd.f32 %v436, %v1041
        %v1043 = vpop.f32.mrf.mxu0
        %1044 = vmatprep.mubr.bf16.mxu0 0
        %1045 = vmatmul.mubr.bf16.gmra.mxu0 %v885
        %v1046 = vpop.f32.mrf.mxu0
        %v1047 = vadd.f32 %v441, %v1046
        %v1048 = vpop.f32.mrf.mxu0
        %v1049 = vpop.f32.mrf.mxu0
        %v1050 = vadd.f32 %v446, %v1049
        %v1051 = vpop.f32.mrf.mxu0
        %1052 = vmatprep.mubr.bf16.mxu0 0
        %1053 = vmatmul.mubr.bf16.gmra.mxu0 %v888
        %v1054 = vpop.f32.mrf.mxu0
        %v1055 = vadd.f32 %v451, %v1054
        %v1056 = vpop.f32.mrf.mxu0
        %v1057 = vpop.f32.mrf.mxu0
        %v1058 = vadd.f32 %v456, %v1057
        %v1059 = vpop.f32.mrf.mxu0
        %1060 = vmatprep.mubr.bf16.mxu0 0
        %1061 = vmatmul.mubr.bf16.gmra.mxu0 %v891
        %v1062 = vpop.f32.mrf.mxu0
        %v1063 = vadd.f32 %v461, %v1062
        %v1064 = vpop.f32.mrf.mxu0
        %v1065 = vpop.f32.mrf.mxu0
        %v1066 = vadd.f32 %v466, %v1065
        %v1067 = vpop.f32.mrf.mxu0
        %1068 = vmatprep.mubr.bf16.mxu0 0
        %1069 = vmatmul.mubr.bf16.gmra.mxu0 %v894
        %v1070 = vpop.f32.mrf.mxu0
        %v1071 = vadd.f32 %v471, %v1070
        %v1072 = vpop.f32.mrf.mxu0
        %v1073 = vpop.f32.mrf.mxu0
        %v1074 = vadd.f32 %v476, %v1073
        %v1075 = vpop.f32.mrf.mxu0
        %1076 = vmatprep.mubr.bf16.mxu0 0
        %1077 = vmatmul.mubr.bf16.gmra.mxu0 %v897
        %v1078 = vpop.f32.mrf.mxu0
        %v1079 = vadd.f32 %v481, %v1078
        %v1080 = vpop.f32.mrf.mxu0
        %v1081 = vpop.f32.mrf.mxu0
        %v1082 = vadd.f32 %v486, %v1081
        %v1083 = vpop.f32.mrf.mxu0
        %1084 = vmatprep.mubr.bf16.mxu0 0
        %1085 = vmatmul.mubr.bf16.gmra.mxu0 %v900
        %v1086 = vpop.f32.mrf.mxu0
        %v1087 = vadd.f32 %v491, %v1086
        %v1088 = vpop.f32.mrf.mxu0
        %v1089 = vpop.f32.mrf.mxu0
        %v1090 = vadd.f32 %v496, %v1089
        %v1091 = vpop.f32.mrf.mxu0
        %1092 = vmatprep.mubr.bf16.mxu0 0
        %1093 = vmatmul.mubr.bf16.gmra.mxu0 %v903
        %v1094 = vpop.f32.mrf.mxu0
        %v1095 = vadd.f32 %v501, %v1094
        %v1096 = vpop.f32.mrf.mxu0
        %v1097 = vpop.f32.mrf.mxu0
        %v1098 = vadd.f32 %v506, %v1097
        %v1099 = vpop.f32.mrf.mxu0
        %1100 = vmatprep.mubr.bf16.mxu0 0
        %1101 = vmatmul.mubr.bf16.gmra.mxu0 %v906
        %v1102 = vpop.f32.mrf.mxu0
        %v1103 = vadd.f32 %v511, %v1102
        %v1104 = vpop.f32.mrf.mxu0
        %v1105 = vpop.f32.mrf.mxu0
        %v1106 = vadd.f32 %v516, %v1105
        %v1107 = vpop.f32.mrf.mxu0
        %1108 = vmatprep.mubr.bf16.mxu0 0
        %1109 = vmatmul.mubr.bf16.gmra.mxu0 %v909
        %v1110 = vpop.f32.mrf.mxu0
        %v1111 = vadd.f32 %v521, %v1110
        %v1112 = vpop.f32.mrf.mxu0
        %v1113 = vpop.f32.mrf.mxu0
        %v1114 = vadd.f32 %v526, %v1113
        %v1115 = vpop.f32.mrf.mxu0
        %1116 = vmatprep.mubr.bf16.mxu0 0
        %1117 = vmatmul.mubr.bf16.gmra.mxu0 %v912
        %v1118 = vpop.f32.mrf.mxu0
        %v1119 = vadd.f32 %v531, %v1118
        %v1120 = vpop.f32.mrf.mxu0
        %v1121 = vpop.f32.mrf.mxu0
        %v1122 = vadd.f32 %v536, %v1121
        %v1123 = vpop.f32.mrf.mxu0
        %1124 = vmatprep.mubr.bf16.mxu0 0
        %1125 = vmatmul.mubr.bf16.gmra.mxu0 %v915
        %v1126 = vpop.f32.mrf.mxu0
        %v1127 = vadd.f32 %v541, %v1126
        %v1128 = vpop.f32.mrf.mxu0
        %v1129 = vpop.f32.mrf.mxu0
        %v1130 = vadd.f32 %v546, %v1129
        %v1131 = vpop.f32.mrf.mxu0
        %1132 = vmatprep.mubr.bf16.mxu0 0
        %1133 = vmatmul.mubr.bf16.gmra.mxu0 %v918
        %v1134 = vpop.f32.mrf.mxu0
        %v1135 = vadd.f32 %v551, %v1134
        %v1136 = vpop.f32.mrf.mxu0
        %v1137 = vpop.f32.mrf.mxu0
        %v1138 = vadd.f32 %v556, %v1137
        %v1139 = vpop.f32.mrf.mxu0
        %1140 = vmatprep.mubr.bf16.mxu0 0
        %1141 = vmatmul.mubr.bf16.gmra.mxu0 %v921
        %v1142 = vpop.f32.mrf.mxu0
        %v1143 = vadd.f32 %v561, %v1142
        %v1144 = vpop.f32.mrf.mxu0
        %v1145 = vpop.f32.mrf.mxu0
        %v1146 = vadd.f32 %v566, %v1145
        %v1147 = vpop.f32.mrf.mxu0
        %1148 = vmatprep.mubr.bf16.mxu0 0
        %1149 = vmatmul.mubr.bf16.gmra.mxu0 %v924
        %v1150 = vpop.f32.mrf.mxu0
        %v1151 = vadd.f32 %v571, %v1150
        %v1152 = vpop.f32.mrf.mxu0
        %v1153 = vpop.f32.mrf.mxu0
        %v1154 = vadd.f32 %v576, %v1153
        %v1155 = vpop.f32.mrf.mxu0
        %1156 = vmatprep.mubr.bf16.mxu0 0
        %1157 = vmatmul.mubr.bf16.gmra.mxu0 %v927
        %v1158 = vpop.f32.mrf.mxu0
        %v1159 = vadd.f32 %v581, %v1158
        %v1160 = vpop.f32.mrf.mxu0
        %v1161 = vpop.f32.mrf.mxu0
        %v1162 = vadd.f32 %v586, %v1161
        %v1163 = vpop.f32.mrf.mxu0
        %1164 = vmatprep.mubr.bf16.mxu0 0
        %1165 = vmatmul.mubr.bf16.gmra.mxu0 %v930
        %v1166 = vpop.f32.mrf.mxu0
        %v1167 = vadd.f32 %v591, %v1166
        %v1168 = vpop.f32.mrf.mxu0
        %v1169 = vpop.f32.mrf.mxu0
        %v1170 = vadd.f32 %v596, %v1169
        %v1171 = vpop.f32.mrf.mxu0
        %1172 = vmatprep.mubr.bf16.mxu0 0
        %1173 = vmatmul.mubr.bf16.gmra.mxu0 %v933
        %v1174 = vpop.f32.mrf.mxu0
        %v1175 = vadd.f32 %v601, %v1174
        %v1176 = vpop.f32.mrf.mxu0
        %v1177 = vpop.f32.mrf.mxu0
        %v1178 = vadd.f32 %v606, %v1177
        %v1179 = vpop.f32.mrf.mxu0
        %1180 = vmatprep.mubr.bf16.mxu0 0
        %1181 = vmatmul.mubr.bf16.gmra.mxu0 %v936
        %v1182 = vpop.f32.mrf.mxu0
        %v1183 = vadd.f32 %v611, %v1182
        %v1184 = vpop.f32.mrf.mxu0
        %v1185 = vpop.f32.mrf.mxu0
        %v1186 = vadd.f32 %v616, %v1185
        %v1187 = vpop.f32.mrf.mxu0
        %1188 = vmatprep.mubr.bf16.mxu0 0
        %1189 = vmatmul.mubr.bf16.gmra.mxu0 %v939
        %v1190 = vpop.f32.mrf.mxu0
        %v1191 = vadd.f32 %v621, %v1190
        %v1192 = vpop.f32.mrf.mxu0
        %v1193 = vpop.f32.mrf.mxu0
        %v1194 = vadd.f32 %v626, %v1193
        %v1195 = vpop.f32.mrf.mxu0
        %1196 = vmatprep.mubr.bf16.mxu0 0
        %1197 = vmatmul.mubr.bf16.gmra.mxu0 %v942
        %v1198 = vpop.f32.mrf.mxu0
        %v1199 = vadd.f32 %v631, %v1198
        %v1200 = vpop.f32.mrf.mxu0
        %v1201 = vpop.f32.mrf.mxu0
        %v1202 = vadd.f32 %v636, %v1201
        %v1203 = vpop.f32.mrf.mxu0
        %1204 = vmatprep.mubr.bf16.mxu0 0
        %1205 = vmatmul.mubr.bf16.gmra.mxu0 %v945
        %v1206 = vpop.f32.mrf.mxu0
        %v1207 = vadd.f32 %v641, %v1206
        %v1208 = vpop.f32.mrf.mxu0
        %v1209 = vpop.f32.mrf.mxu0
        %v1210 = vadd.f32 %v646, %v1209
        %v1211 = vpop.f32.mrf.mxu0
        %1212 = vmatprep.mubr.bf16.mxu0 0
        %1213 = vmatmul.mubr.bf16.gmra.mxu0 %v948
        %v1214 = vpop.f32.mrf.mxu0
        %v1215 = vadd.f32 %v651, %v1214
        %v1216 = vpop.f32.mrf.mxu0
        %v1217 = vpop.f32.mrf.mxu0
        %v1218 = vadd.f32 %v656, %v1217
        %v1219 = vpop.f32.mrf.mxu0
        %1220 = vmatprep.mubr.bf16.mxu0 0
        %1221 = vmatmul.mubr.bf16.gmra.mxu0 %v951
        %v1222 = vpop.f32.mrf.mxu0
        %v1223 = vadd.f32 %v661, %v1222
        %v1224 = vpop.f32.mrf.mxu0
        %v1225 = vpop.f32.mrf.mxu0
        %v1226 = vadd.f32 %v666, %v1225
        %v1227 = vpop.f32.mrf.mxu0
        %1228 = vmatprep.mubr.bf16.mxu0 0
        %1229 = vmatmul.mubr.bf16.gmra.mxu0 %v954
        %v1230 = vpop.f32.mrf.mxu0
        %v1231 = vadd.f32 %v671, %v1230
        %v1232 = vpop.f32.mrf.mxu0
        %v1233 = vpop.f32.mrf.mxu0
        %v1234 = vadd.f32 %v676, %v1233
        %v1235 = vpop.f32.mrf.mxu0
        %1236 = vmatprep.mubr.bf16.mxu0 0
        %1237 = vmatmul.mubr.bf16.gmra.mxu0 %v957
        %v1238 = vpop.f32.mrf.mxu0
        %v1239 = vadd.f32 %v681, %v1238
        %v1240 = vpop.f32.mrf.mxu0
        %v1241 = vpop.f32.mrf.mxu0
        %v1242 = vadd.f32 %v686, %v1241
        %v1243 = vpop.f32.mrf.mxu0
        %1244 = vmatprep.mubr.bf16.mxu0 0
        %1245 = vmatmul.mubr.bf16.gmra.mxu0 %v960
        %v1246 = vpop.f32.mrf.mxu0
        %v1247 = vadd.f32 %v691, %v1246
        %v1248 = vpop.f32.mrf.mxu0
        %v1249 = vpop.f32.mrf.mxu0
        %v1250 = vadd.f32 %v696, %v1249
        %v1251 = vpop.f32.mrf.mxu0
        %1252 = vmatprep.mubr.bf16.mxu0 0
        %1253 = vmatmul.mubr.bf16.gmra.mxu0 %v963
        %v1254 = vpop.f32.mrf.mxu0
        %v1255 = vadd.f32 %v701, %v1254
        %v1256 = vpop.f32.mrf.mxu0
        %v1257 = vpop.f32.mrf.mxu0
        %v1258 = vadd.f32 %v706, %v1257
        %v1259 = vpop.f32.mrf.mxu0
        %1260 = vdwg.mxu0
        %v1261 = vmax.f32 %v1007, 0.0
        %v1262 = vmax.f32 %v1010, 0.0
        %v1263 = vmax.f32 %v1015, 0.0
        %v1264 = vmax.f32 %v1018, 0.0
        %v1265 = vmax.f32 %v1023, 0.0
        %v1266 = vmax.f32 %v1026, 0.0
        %v1267 = vmax.f32 %v1031, 0.0
        %v1268 = vmax.f32 %v1034, 0.0
        %v1269 = vmax.f32 %v1039, 0.0
        %v1270 = vmax.f32 %v1042, 0.0
        %v1271 = vmax.f32 %v1047, 0.0
        %v1272 = vmax.f32 %v1050, 0.0
        %v1273 = vmax.f32 %v1055, 0.0
        %v1274 = vmax.f32 %v1058, 0.0
        %v1275 = vmax.f32 %v1063, 0.0
        %v1276 = vmax.f32 %v1066, 0.0
        %v1277 = vmax.f32 %v1071, 0.0
        %v1278 = vmax.f32 %v1074, 0.0
        %v1279 = vmax.f32 %v1079, 0.0
        %v1280 = vmax.f32 %v1082, 0.0
        %v1281 = vmax.f32 %v1087, 0.0
        %v1282 = vmax.f32 %v1090, 0.0
        %v1283 = vmax.f32 %v1095, 0.0
        %v1284 = vmax.f32 %v1098, 0.0
        %v1285 = vmax.f32 %v1103, 0.0
        %v1286 = vmax.f32 %v1106, 0.0
        %v1287 = vmax.f32 %v1111, 0.0
        %v1288 = vmax.f32 %v1114, 0.0
        %v1289 = vmax.f32 %v1119, 0.0
        %v1290 = vmax.f32 %v1122, 0.0
        %v1291 = vmax.f32 %v1127, 0.0
        %v1292 = vmax.f32 %v1130, 0.0
        %v1293 = vmax.f32 %v1135, 0.0
        %v1294 = vmax.f32 %v1138, 0.0
        %v1295 = vmax.f32 %v1143, 0.0
        %v1296 = vmax.f32 %v1146, 0.0
        %v1297 = vmax.f32 %v1151, 0.0
        %v1298 = vmax.f32 %v1154, 0.0
        %v1299 = vmax.f32 %v1159, 0.0
        %v1300 = vmax.f32 %v1162, 0.0
        %v1301 = vmax.f32 %v1167, 0.0
        %v1302 = vmax.f32 %v1170, 0.0
        %v1303 = vmax.f32 %v1175, 0.0
        %v1304 = vmax.f32 %v1178, 0.0
        %v1305 = vmax.f32 %v1183, 0.0
        %v1306 = vmax.f32 %v1186, 0.0
        %v1307 = vmax.f32 %v1191, 0.0
        %v1308 = vmax.f32 %v1194, 0.0
        %v1309 = vmax.f32 %v1199, 0.0
        %v1310 = vmax.f32 %v1202, 0.0
        %v1311 = vmax.f32 %v1207, 0.0
        %v1312 = vmax.f32 %v1210, 0.0
        %v1313 = vmax.f32 %v1215, 0.0
        %v1314 = vmax.f32 %v1218, 0.0
        %v1315 = vmax.f32 %v1223, 0.0
        %v1316 = vmax.f32 %v1226, 0.0
        %v1317 = vmax.f32 %v1231, 0.0
        %v1318 = vmax.f32 %v1234, 0.0
        %v1319 = vmax.f32 %v1239, 0.0
        %v1320 = vmax.f32 %v1242, 0.0
        %v1321 = vmax.f32 %v1247, 0.0
        %v1322 = vmax.f32 %v1250, 0.0
        %v1323 = vmax.f32 %v1255, 0.0
        %v1324 = vmax.f32 %v1258, 0.0
        %v1325 = vld [vmem:[%s3] sm:$0x77]
        %v1326 = vld [vmem:[%s3 + $0x8] sm:$0x77]
        %v1327 = vpack.c.bf16 %v1262, %v1261
        %v1328 = vpack.c.bf16 %v1264, %v1263
        %v1329 = vpack.c.bf16 %v1266, %v1265
        %v1330 = vpack.c.bf16 %v1268, %v1267
        %v1331 = vpack.c.bf16 %v1270, %v1269
        %v1332 = vpack.c.bf16 %v1272, %v1271
        %v1333 = vpack.c.bf16 %v1274, %v1273
        %v1334 = vpack.c.bf16 %v1276, %v1275
        %v1335 = vpack.c.bf16 %v1278, %v1277
        %v1336 = vpack.c.bf16 %v1280, %v1279
        %v1337 = vpack.c.bf16 %v1282, %v1281
        %v1338 = vpack.c.bf16 %v1284, %v1283
        %v1339 = vpack.c.bf16 %v1286, %v1285
        %v1340 = vpack.c.bf16 %v1288, %v1287
        %v1341 = vpack.c.bf16 %v1290, %v1289
        %v1342 = vpack.c.bf16 %v1292, %v1291
        %v1343 = vpack.c.bf16 %v1294, %v1293
        %v1344 = vpack.c.bf16 %v1296, %v1295
        %v1345 = vpack.c.bf16 %v1298, %v1297
        %v1346 = vpack.c.bf16 %v1300, %v1299
        %v1347 = vpack.c.bf16 %v1302, %v1301
        %v1348 = vpack.c.bf16 %v1304, %v1303
        %v1349 = vpack.c.bf16 %v1306, %v1305
        %v1350 = vpack.c.bf16 %v1308, %v1307
        %v1351 = vpack.c.bf16 %v1310, %v1309
        %v1352 = vpack.c.bf16 %v1312, %v1311
        %v1353 = vpack.c.bf16 %v1314, %v1313
        %v1354 = vpack.c.bf16 %v1316, %v1315
        %v1355 = vpack.c.bf16 %v1318, %v1317
        %v1356 = vpack.c.bf16 %v1320, %v1319
        %v1357 = vpack.c.bf16 %v1322, %v1321
        %v1358 = vpack.c.bf16 %v1324, %v1323
        %v1359 = vld [vmem:[%s4] sm:$0x3f]
        %1361 = vset.pattern.permute.xlu0 0
        %1362 = vperm.xlu0 %1361, %v1359
        %v1363 = vpop.permute.xlu0 %1362
        %v1367 = vunpack.c.l.b16 %v1325
        %v1368 = vunpack.c.h.b16 %v1325
        %v1369 = vunpack.c.l.b16 %v1326
        %v1370 = vunpack.c.h.b16 %v1326
        %v1371 = vpack.c.b16 %v1367, %v1367
        %v1372 = vpack.c.b16 %v1368, %v1368
        %v1373 = vpack.c.b16 %v1369, %v1369
        %v1374 = vpack.c.b16 %v1370, %v1370
        %1379 = vmatprep.subr.bf16.mxu0 0
        %1380 = vmatpush1.bf16.msra.mxu0 %v1334
        %1381 = vmatprep.subr.bf16.mxu0 0
        %1382 = vmatpush1.bf16.msra.mxu0 %v1333
        %1383 = vmatprep.subr.bf16.mxu0 0
        %1384 = vmatpush1.bf16.msra.mxu0 %v1332
        %1385 = vmatprep.subr.bf16.mxu0 0
        %1386 = vmatpush1.bf16.msra.mxu0 %v1331
        %1387 = vmatprep.subr.bf16.mxu0 0
        %1388 = vmatpush1.bf16.msra.mxu0 %v1330
        %1389 = vmatprep.subr.bf16.mxu0 0
        %1390 = vmatpush1.bf16.msra.mxu0 %v1329
        %1391 = vmatprep.subr.bf16.mxu0 0
        %1392 = vmatpush1.bf16.msra.mxu0 %v1328
        %1393 = vmatprep.subr.bf16.mxu0 0
        %1394 = vmatpush1.bf16.msra.mxu0 %v1327
        %1395 = vmatprep.subr.bf16.mxu0 0
        %1396 = vmatpush2.bf16.msra.mxu0 %v1342
        %1397 = vmatprep.subr.bf16.mxu0 0
        %1398 = vmatpush2.bf16.msra.mxu0 %v1341
        %1399 = vmatprep.subr.bf16.mxu0 0
        %1400 = vmatpush2.bf16.msra.mxu0 %v1340
        %1401 = vmatprep.subr.bf16.mxu0 0
        %1402 = vmatpush2.bf16.msra.mxu0 %v1339
        %1403 = vmatprep.subr.bf16.mxu0 0
        %1404 = vmatpush2.bf16.msra.mxu0 %v1338
        %1405 = vmatprep.subr.bf16.mxu0 0
        %1406 = vmatpush2.bf16.msra.mxu0 %v1337
        %1407 = vmatprep.subr.bf16.mxu0 0
        %1408 = vmatpush2.bf16.msra.mxu0 %v1336
        %1409 = vmatprep.subr.bf16.mxu0 0
        %1410 = vmatpush2.bf16.msra.mxu0 %v1335
        %1411 = vmatprep.mubr.bf16.mxu0 %v1372
        %1412 = vmatmul.mubr.bf16.gmra.mxu0 %v1371
        %v1413 = vpop.f32.mrf.mxu0
        %v1414 = vadd.f32 %v1363, %v1413
        %v1415 = vpop.f32.mrf.mxu0
        %v1416 = vpop.f32.mrf.mxu0
        %v1417 = vpop.f32.mrf.mxu0
        %1418 = vdwg.mxu0
        %1419 = vmatprep.subr.bf16.mxu0 0
        %1420 = vmatpush1.bf16.msra.mxu0 %v1350
        %1421 = vmatprep.subr.bf16.mxu0 0
        %1422 = vmatpush1.bf16.msra.mxu0 %v1349
        %1423 = vmatprep.subr.bf16.mxu0 0
        %1424 = vmatpush1.bf16.msra.mxu0 %v1348
        %1425 = vmatprep.subr.bf16.mxu0 0
        %1426 = vmatpush1.bf16.msra.mxu0 %v1347
        %1427 = vmatprep.subr.bf16.mxu0 0
        %1428 = vmatpush1.bf16.msra.mxu0 %v1346
        %1429 = vmatprep.subr.bf16.mxu0 0
        %1430 = vmatpush1.bf16.msra.mxu0 %v1345
        %1431 = vmatprep.subr.bf16.mxu0 0
        %1432 = vmatpush1.bf16.msra.mxu0 %v1344
        %1433 = vmatprep.subr.bf16.mxu0 0
        %1434 = vmatpush1.bf16.msra.mxu0 %v1343
        %1435 = vmatprep.subr.bf16.mxu0 0
        %1436 = vmatpush2.bf16.msra.mxu0 %v1358
        %1437 = vmatprep.subr.bf16.mxu0 0
        %1438 = vmatpush2.bf16.msra.mxu0 %v1357
        %1439 = vmatprep.subr.bf16.mxu0 0
        %1440 = vmatpush2.bf16.msra.mxu0 %v1356
        %1441 = vmatprep.subr.bf16.mxu0 0
        %1442 = vmatpush2.bf16.msra.mxu0 %v1355
        %1443 = vmatprep.subr.bf16.mxu0 0
        %1444 = vmatpush2.bf16.msra.mxu0 %v1354
        %1445 = vmatprep.subr.bf16.mxu0 0
        %1446 = vmatpush2.bf16.msra.mxu0 %v1353
        %1447 = vmatprep.subr.bf16.mxu0 0
        %1448 = vmatpush2.bf16.msra.mxu0 %v1352
        %1449 = vmatprep.subr.bf16.mxu0 0
        %1450 = vmatpush2.bf16.msra.mxu0 %v1351
        %1451 = vmatprep.mubr.bf16.mxu0 %v1374
        %1452 = vmatmul.mubr.bf16.gmra.mxu0 %v1373
        %v1453 = vpop.f32.mrf.mxu0
        %v1454 = vadd.f32 %v1414, %v1453
        %v1455 = vpop.f32.mrf.mxu0
        %v1456 = vpop.f32.mrf.mxu0
        %v1457 = vpop.f32.mrf.mxu0
        %1458 = vdwg.mxu0
        %v1459 = vmul.f32 %v1454, 1.442695
        %v1460 = vpow.pop %v1459
        %v1462 = vrot.slane %v258, 2
        %v1464 = vmul.f32 %v1460, %v1462
        %v1466 = vrot.slane %v1464, 3
        %v1468 = vadd.f32 %v1454, %v1466
        %1469 = vst [vmem:[%s246] sm:$0x7] %v1468
        %v1470 = vmul.f32 %v1460, %v1460
        %v1471 = vmul.f32 %v1454, %v1454
        %v1473 = vrot.slane %v1471, 5
        %v1475 = vadd.f32 %v1470, %v1473
        %v1476 = vsub.f32 %v1475, %v1454
        %v1477 = vsub.f32 %v1476, 0.5
        %v1479 = vrot.slane %v1477, 3
        %v1481 = vsel %vm966, %v1479, 0.0
        %v1482 = vrot.slane %v1481, 4
        %v1483 = vadd.f32 %v1481, %v1482
        %v1484 = vrot.slane %v1483, 2
        %v1485 = vadd.f32 %v1483, %v1484
        %v1486 = vrot.slane %v1485, 1
        %v1487 = vadd.f32 %v1485, %v1486
        %1488 = vst [vmem:[%s252] sm:$0x1] %v1487
        %s1489 = sand.u32 %s142, 1
        %s1490 = scalar_lea.sflag [#allocation3], %s1489
        %s1491 = sand.u32 %s142, 1
        %s1492 = smul.addr %s1491, 4
        %s1493 = scalar_lea.vmem [#allocation2], %s1492
        %s1494 = sand.u32 %s168, 1
        %s1495 = scalar_lea.sflag [#allocation5], %s1494
        %s1496 = sand.u32 %s168, 1
        %s1497 = scalar_lea.vmem [#allocation4], %s1496
        // Predicated region
        $region41: #{tpu_custom_call.1} parent=39 // pred_check
          %p1498 = pneg %p152
        $region42: #{tpu_custom_call.1} parent=39 // pred_check_branch
          %1500 = sbr.rel (%p1498) target = $region44
        $region43: #{tpu_custom_call.1} parent=39 // pred_region
          %s1502 = ssub.s32 64, 64
          %1503 = vsyncadd %s1490, %s1502
          %s1504 = smul.addr %s24, 64
          %s1505 = scalar_lea.hbm %s5, %s1504
          %s1507 = sshll.u32 %s1493, 4
          %s1508 = int_to_ptr.vmem [resolvable:$true] %s1507
          %1510 = dma.vmem_to_hbm [thread:$0]  %s1508, 64, %s1505, %s1490
        $region44: #{tpu_custom_call.1} parent=39 // pred_fallthru
          _
        // Predicated region
        $region45: #{tpu_custom_call.1} parent=39 // pred_check
          %p1511 = pneg %p178
        $region46: #{tpu_custom_call.1} parent=39 // pred_check_branch
          %1513 = sbr.rel (%p1511) target = $region48
        $region47: #{tpu_custom_call.1} parent=39 // pred_region
          %s1515 = ssub.s32 16, 16
          %1516 = vsyncadd %s1495, %s1515
          %s1517 = smul.addr %s24, 16
          %s1518 = scalar_lea.hbm %s6, %s1517
          %s1520 = sshll.u32 %s1497, 4
          %s1521 = int_to_ptr.vmem [resolvable:$true] %s1520
          %1523 = dma.vmem_to_hbm [thread:$0]  %s1521, 16, %s1518, %s1495
        $region48: #{tpu_custom_call.1} parent=39 // pred_fallthru
          _
      $region40: #{tpu_custom_call.1} parent=5 // pred_fallthru
        _
      %p1524 = scmp.le.s32.totalorder 2, %s19
      // Predicated region
      $region49: #{tpu_custom_call.1} parent=5 // pred_check
        %p1525 = pneg %p1524
      $region50: #{tpu_custom_call.1} parent=5 // pred_check_branch
        %1527 = sbr.rel (%p1525) target = $region52
      $region51: #{tpu_custom_call.1} parent=5 // pred_region
        %s1528 = ssub.s32 %s19, 2
        // Predicated region
        $region53: #{tpu_custom_call.1} parent=51 // pred_check
          %p1529 = pneg %p158
        $region54: #{tpu_custom_call.1} parent=51 // pred_check_branch
          %1531 = sbr.rel (%p1529) target = $region56
        $region55: #{tpu_custom_call.1} parent=51 // pred_region
          %s1532 = sand.u32 %s143, 1
          %s1533 = scalar_lea.sflag [#allocation3], %s1532
          %s1534 = sand.u32 %s143, 1
          %s1535 = smul.addr %s1534, 4
          %s1536 = scalar_lea.vmem [#allocation2], %s1535
          %1537 = dma.done %s1533, 64
        $region56: #{tpu_custom_call.1} parent=51 // pred_fallthru
          _
        // Predicated region
        $region57: #{tpu_custom_call.1} parent=51 // pred_check
          %p1538 = pneg %p184
        $region58: #{tpu_custom_call.1} parent=51 // pred_check_branch
          %1540 = sbr.rel (%p1538) target = $region60
        $region59: #{tpu_custom_call.1} parent=51 // pred_region
          %s1541 = sand.u32 %s169, 1
          %s1542 = scalar_lea.sflag [#allocation5], %s1541
          %s1543 = sand.u32 %s169, 1
          %s1544 = scalar_lea.vmem [#allocation4], %s1543
          %1545 = dma.done %s1542, 16
        $region60: #{tpu_custom_call.1} parent=51 // pred_fallthru
          _
      $region52: #{tpu_custom_call.1} parent=5 // pred_fallthru
        _
    $region6: #{tpu_custom_call.1} parent=1 // loop_footer
      %s23 = sadd.s32 1, %s19
    $region7: #{tpu_custom_call.1} parent=1 // loop_footer_branch
      %18 = sbr.rel target = $region3
    $region8: #{tpu_custom_call.1} parent=1 // loop_exit
      _
    %1546 = vsyncpa [#allocation3], 1
    %s1547 = scalar_lea.sflag [#allocation3], 1
    %1548 = vsyncpa %s1547, 1
    %1549 = vsyncpa [#allocation5], 1
    %s1550 = scalar_lea.sflag [#allocation5], 1
    %1551 = vsyncpa %s1550, 1

</llo_original>
